<compile_context>
chip_gen: v7x
topology: tpu7x:2x2x1
jax: 0.10.0
libtpu: 0.0.40
codegen_flags: <defaults>
</compile_context>

<pallas_src>
import functools

import jax
import jax.numpy as jnp
from jax.experimental import pallas as pl
from jax.experimental.pallas import tpu as pltpu


def _round_up(x, m):
    return ((x + m - 1) // m) * m


def _vmem_capacity_bytes():
    """Per-core VMEM capacity; conservative (v7x-sized) fallback."""
    try:
        info = pltpu.get_tpu_info()
        cap = getattr(info, "vmem_capacity_bytes", None)
        if cap:
            return int(cap)
    except Exception:
        pass
    return 64 * 1024 * 1024


def _tiling(rows, hw, dtype):
    """Pick (TR, TC, vmem_limit_bytes).

    TR is a multiple of the dtype's sublane packing, TC a lane-dense multiple
    of 128.  Tile byte budget is generation-aware: ~4 MiB/stream on 64 MiB
    VMEM parts (v7x), ~8 MiB/stream on 128 MiB VMEM parts (v5e/v6e).
    """
    itemsize = jnp.dtype(dtype).itemsize
    sublane = {4: 8, 2: 16, 1: 32}.get(itemsize, 8)

    vmem = _vmem_capacity_bytes()
    big_vmem = vmem >= 100 * 1024 * 1024
    tile_budget = (8 if big_vmem else 4) * 1024 * 1024   # bytes per stream tile
    tc_cap = 4096 if big_vmem else 2048

    tc = min(_round_up(hw, 128), tc_cap)

    tr_fit = max(sublane, (tile_budget // (tc * itemsize)) // sublane * sublane)
    tr = min(1024, tr_fit, _round_up(rows, sublane))

    # Guarantee >= 2 row tiles (v7x megacore sharding) whenever rows allow.
    if pl.cdiv(rows, tr) < 2 and rows > sublane:
        tr = max(sublane, _round_up(pl.cdiv(rows, 2), sublane))

    # Scoped-VMEM limit: apply kernel streams 3 double-buffered big tiles.
    need = 3 * 2 * tr * tc * itemsize
    vmem_limit = min(int(0.75 * vmem), max(32 << 20, need + (8 << 20)))
    return tr, tc, vmem_limit


# ---------------------------------------------------------------------------
# Kernel 1: fused U = x + y and global-average-pool (mean over spatial lanes).
# Layout (rows, cols) = (B*C, HW); the column grid axis is the reduction:
# accumulate per-row sums in VMEM scratch, scale by 1/HW and store on the
# last step.  Ragged last column tile is lane-masked (no host-side padding).
# ---------------------------------------------------------------------------
def _sum_gap_kernel(x_ref, y_ref, o_ref, acc_ref, *, hw, tc, mask_lanes):
    j = pl.program_id(1)

    @pl.when(j == 0)
    def _():
        acc_ref[...] = jnp.zeros_like(acc_ref)

    u = x_ref[...].astype(jnp.float32) + y_ref[...].astype(jnp.float32)
    if mask_lanes:
        lane = jax.lax.broadcasted_iota(jnp.int32, u.shape, dimension=1)
        u = jnp.where(lane + j * tc < hw, u, 0.0)
    acc_ref[...] += jnp.sum(u, axis=-1, keepdims=True)

    @pl.when(j == pl.num_programs(1) - 1)
    def _():
        o_ref[...] = acc_ref[...] * (1.0 / hw)


def _gap_mean(x2, y2, tr, tc, vmem_limit):
    rows, hw = x2.shape
    grid = (pl.cdiv(rows, tr), pl.cdiv(hw, tc))
    kernel = functools.partial(
        _sum_gap_kernel, hw=hw, tc=tc, mask_lanes=(hw % tc) != 0
    )
    return pl.pallas_call(
        kernel,
        out_shape=jax.ShapeDtypeStruct((rows, 1), jnp.float32),
        grid_spec=pltpu.PrefetchScalarGridSpec(
            num_scalar_prefetch=0,
            grid=grid,
            in_specs=[
                pl.BlockSpec((tr, tc), lambda i, j: (i, j)),
                pl.BlockSpec((tr, tc), lambda i, j: (i, j)),
            ],
            out_specs=pl.BlockSpec((tr, 1), lambda i, j: (i, 0)),
            scratch_shapes=[pltpu.VMEM((tr, 1), jnp.float32)],
        ),
        compiler_params=pltpu.CompilerParams(
            dimension_semantics=("parallel", "arbitrary"),
            vmem_limit_bytes=vmem_limit,
        ),
    )(x2, y2)


# ---------------------------------------------------------------------------
# Kernel 2: apply per-(batch, channel) softmax attention:
#   out[r, :] = a0[r] * x[r, :] + a1[r] * y[r, :]   with r = b*C + c
# Weights arrive as a single resident (rows, 2) stream; 2D tiled grid,
# lane-dense output stores, both axes "parallel" (v7x megacore sharding).
# Ragged edge tiles need no masking: out-of-bounds output stores are dropped.
# ---------------------------------------------------------------------------
def _apply_att_kernel(x_ref, y_ref, w_ref, o_ref):
    a0 = w_ref[:, 0:1]
    a1 = w_ref[:, 1:2]
    out = a0 * x_ref[...].astype(jnp.float32) + a1 * y_ref[...].astype(jnp.float32)
    o_ref[...] = out.astype(o_ref.dtype)


def _apply_att(x2, y2, w, tr, tc, vmem_limit):
    rows, hw = x2.shape
    grid = (pl.cdiv(rows, tr), pl.cdiv(hw, tc))
    return pl.pallas_call(
        _apply_att_kernel,
        out_shape=jax.ShapeDtypeStruct((rows, hw), x2.dtype),
        grid_spec=pltpu.PrefetchScalarGridSpec(
            num_scalar_prefetch=0,
            grid=grid,
            in_specs=[
                pl.BlockSpec((tr, tc), lambda i, j: (i, j)),
                pl.BlockSpec((tr, tc), lambda i, j: (i, j)),
                pl.BlockSpec((tr, 2), lambda i, j: (i, 0)),  # resident per row tile
            ],
            out_specs=pl.BlockSpec((tr, tc), lambda i, j: (i, j)),
        ),
        compiler_params=pltpu.CompilerParams(
            dimension_semantics=("parallel", "parallel"),
            vmem_limit_bytes=vmem_limit,
        ),
    )(x2, y2, w)


def attgate2_forward(x, y, params, eps=1e-5):
    """AttGate2 forward (M=2). x, y: (B, C, H, W). Returns (B, C, H, W)."""
    B, C, H, W = x.shape
    HW = H * W
    rows = B * C

    tr, tc, vmem_limit = _tiling(rows, HW, x.dtype)
    x2 = x.reshape(rows, HW)           # free views, no padded copies
    y2 = y.reshape(rows, HW)

    # --- squeeze: S = GAP(x + y) -> (B, C)      [Pallas kernel 1] ------------
    s = _gap_mean(x2, y2, tr, tc, vmem_limit)[:, 0].reshape(B, C)

    # --- excite: tiny FC path in plain JAX (only B*max(C,d) scalars) ---------
    # TODO(synk): BatchNorm uses inference-mode running statistics only
    # (training-mode batch statistics are not modeled).
    z = s @ params["w_fc"].T                                             # (B, d)
    z = (z - params["bn_mean"]) * (
        params["bn_gamma"] / jnp.sqrt(params["bn_var"] + eps)
    ) + params["bn_beta"]
    z = jax.nn.relu(z)
    a0 = z @ params["w_a0"].T + params["b_a0"]                           # (B, C)
    a1 = z @ params["w_a1"].T + params["b_a1"]                           # (B, C)
    att = jax.nn.softmax(jnp.stack([a0, a1], axis=1), axis=1)            # (B, 2, C)

    # --- apply: out = att0 * x + att1 * y       [Pallas kernel 2] ------------
    w = jnp.stack(
        [att[:, 0, :].reshape(rows), att[:, 1, :].reshape(rows)], axis=-1
    ).astype(jnp.float32)                                                # (rows, 2)
    out2 = _apply_att(x2, y2, w, tr, tc, vmem_limit)
    return out2.reshape(B, C, H, W)


if __name__ == "__main__":
    B, C, H, W = 2, 4, 16, 16
    r = 4
    d = max(int(C / r), 32)  # as in the module: d = max(in_ch // r, 32) = 32

    key = jax.random.PRNGKey(0)
    kx, ky, k1, k2, k3, k4, k5, k6, k7 = jax.random.split(key, 9)
    x = jax.random.normal(kx, (B, C, H, W), dtype=jnp.float32)
    y = jax.random.normal(ky, (B, C, H, W), dtype=jnp.float32)

    params = dict(
        w_fc=0.2 * jax.random.normal(k1, (d, C), dtype=jnp.float32),
        bn_gamma=jnp.ones((d,), jnp.float32)
        + 0.1 * jax.random.normal(k2, (d,), dtype=jnp.float32),
        bn_beta=0.1 * jax.random.normal(k3, (d,), dtype=jnp.float32),
        bn_mean=0.1 * jax.random.normal(k4, (d,), dtype=jnp.float32),
        bn_var=jnp.abs(jax.random.normal(k5, (d,), dtype=jnp.float32)) + 0.5,
        w_a0=0.2 * jax.random.normal(k6, (C, d), dtype=jnp.float32),
        b_a0=jnp.zeros((C,), jnp.float32),
        w_a1=0.2 * jax.random.normal(k7, (C, d), dtype=jnp.float32),
        b_a1=jnp.zeros((C,), jnp.float32),
    )

    # jit so the tiny excitation glue fuses between the two pallas_calls.
    fwd = jax.jit(attgate2_forward)
    out = jax.block_until_ready(fwd(x, y, params))

    # Pure-JAX reference mirroring the torch module (inference-mode BN).
    eps = 1e-5
    U = x + y
    S = U.mean(axis=(2, 3))                                              # (B, C)
    Z = S @ params["w_fc"].T
    Z = (Z - params["bn_mean"]) * (
        params["bn_gamma"] / jnp.sqrt(params["bn_var"] + eps)
    ) + params["bn_beta"]
    Z = jax.nn.relu(Z)
    A0 = Z @ params["w_a0"].T + params["b_a0"]
    A1 = Z @ params["w_a1"].T + params["b_a1"]
    ATT = jax.nn.softmax(jnp.stack([A0, A1], axis=1), axis=1)            # (B, 2, C)
    ref = ATT[:, 0][:, :, None, None] * x + ATT[:, 1][:, :, None, None] * y

    assert out.shape == (B, C, H, W)
    err = float(jnp.max(jnp.abs(out - ref)))
    assert jnp.allclose(out, ref, atol=1e-5, rtol=1e-5), err

    print("KERNEL_OK")
</pallas_src>

<mosaic_0001>
module attributes {stable_mosaic.version = 11 : i64} {
  func.func @_sum_gap_kernel(%arg0: i32, %arg1: i32, %arg2: memref<8x256xf32, #tpu.memory_space<vmem>>, %arg3: memref<8x256xf32, #tpu.memory_space<vmem>>, %arg4: memref<8x1xf32, #tpu.memory_space<vmem>>, %arg5: memref<8x1xf32, #tpu.memory_space<vmem>>) attributes {dimension_semantics = [#tpu.dimension_semantics<parallel>, #tpu.dimension_semantics<arbitrary>], iteration_bounds = array<i64: 1, 1>, scalar_prefetch = 0 : i64, scratch_operands = 1 : i64, tpu.core_type = #tpu.core_type<tc>, window_params = [{transform_indices = @transform_0, window_bounds = array<i64: 8, 256>}, {transform_indices = @transform_1, window_bounds = array<i64: 8, 256>}, {transform_indices = @transform_2, window_bounds = array<i64: 8, 1>}]} {
    %c0_i32 = arith.constant 0 : i32
    %0 = arith.cmpi eq, %arg1, %c0_i32 : i32
    %1 = arith.extui %0 : i1 to i32
    %c0_i32_0 = arith.constant 0 : i32
    %2 = arith.cmpi ne, %1, %c0_i32_0 : i32
    scf.if %2 {
      %cst_10 = arith.constant 0.000000e+00 : f32
      %14 = vector.broadcast %cst_10 : f32 to vector<8x1xf32>
      %c0_11 = arith.constant 0 : index
      %c0_12 = arith.constant 0 : index
      %15 = vector.load %arg5[%c0_11, %c0_12] : memref<8x1xf32, #tpu.memory_space<vmem>>, vector<8x1xf32>
      tpu.vector_store %arg5[%c0_11, %c0_12], %14 {strides = array<i32>} : memref<8x1xf32, #tpu.memory_space<vmem>>, vector<8x1xf32>,
    } else {
    }
    %c0 = arith.constant 0 : index
    %c0_1 = arith.constant 0 : index
    %3 = vector.load %arg2[%c0, %c0_1] : memref<8x256xf32, #tpu.memory_space<vmem>>, vector<8x256xf32>
    %c0_2 = arith.constant 0 : index
    %c0_3 = arith.constant 0 : index
    %4 = vector.load %arg3[%c0_2, %c0_3] : memref<8x256xf32, #tpu.memory_space<vmem>>, vector<8x256xf32>
    %5 = arith.addf %3, %4 : vector<8x256xf32>
    %c0_4 = arith.constant 0 : index
    %c0_5 = arith.constant 0 : index
    %6 = vector.load %arg5[%c0_4, %c0_5] : memref<8x1xf32, #tpu.memory_space<vmem>>, vector<8x1xf32>
    %cst = arith.constant dense<0.000000e+00> : vector<8xf32>
    %7 = vector.multi_reduction <add>, %5, %cst [1] : vector<8x256xf32> to vector<8xf32>
    %8 = vector.shape_cast %7 : vector<8xf32> to vector<8x1xf32>
    %9 = arith.addf %6, %8 : vector<8x1xf32>
    %c0_6 = arith.constant 0 : index
    %c0_7 = arith.constant 0 : index
    %10 = vector.load %arg5[%c0_6, %c0_7] : memref<8x1xf32, #tpu.memory_space<vmem>>, vector<8x1xf32>
    tpu.vector_store %arg5[%c0_6, %c0_7], %9 {strides = array<i32>} : memref<8x1xf32, #tpu.memory_space<vmem>>, vector<8x1xf32>,
    %c0_i32_8 = arith.constant 0 : i32
    %11 = arith.cmpi eq, %arg1, %c0_i32_8 : i32
    %12 = arith.extui %11 : i1 to i32
    %c0_i32_9 = arith.constant 0 : i32
    %13 = arith.cmpi ne, %12, %c0_i32_9 : i32
    scf.if %13 {
      %c0_10 = arith.constant 0 : index
      %c0_11 = arith.constant 0 : index
      %14 = vector.load %arg5[%c0_10, %c0_11] : memref<8x1xf32, #tpu.memory_space<vmem>>, vector<8x1xf32>
      %cst_12 = arith.constant 3.906250e-03 : f32
      %15 = vector.broadcast %cst_12 : f32 to vector<8x1xf32>
      %16 = arith.mulf %14, %15 : vector<8x1xf32>
      %c0_13 = arith.constant 0 : index
      %c0_14 = arith.constant 0 : index
      %17 = vector.load %arg4[%c0_13, %c0_14] : memref<8x1xf32, #tpu.memory_space<vmem>>, vector<8x1xf32>
      tpu.vector_store %arg4[%c0_13, %c0_14], %16 {strides = array<i32>} : memref<8x1xf32, #tpu.memory_space<vmem>>, vector<8x1xf32>,
    } else {
    }
    return
  }
  func.func @transform_0(%arg0: i32, %arg1: i32) -> (i32, i32) {
    %c0_i32 = arith.constant 0 : i32
    return %arg0, %arg1 : i32, i32
  }
  func.func @transform_1(%arg0: i32, %arg1: i32) -> (i32, i32) {
    %c0_i32 = arith.constant 0 : i32
    return %arg0, %arg1 : i32, i32
  }
  func.func @transform_2(%arg0: i32, %arg1: i32) -> (i32, i32) {
    %c0_i32 = arith.constant 0 : i32
    %c0_i32_0 = arith.constant 0 : i32
    return %arg0, %c0_i32 : i32, i32
  }
}

module attributes {stable_mosaic.version = 11 : i64} {
  func.func @_apply_att_kernel(%arg0: i32, %arg1: i32, %arg2: memref<8x256xf32, #tpu.memory_space<vmem>>, %arg3: memref<8x256xf32, #tpu.memory_space<vmem>>, %arg4: memref<8x2xf32, #tpu.memory_space<vmem>>, %arg5: memref<8x256xf32, #tpu.memory_space<vmem>>) attributes {dimension_semantics = [#tpu.dimension_semantics<parallel>, #tpu.dimension_semantics<parallel>], iteration_bounds = array<i64: 1, 1>, scalar_prefetch = 0 : i64, scratch_operands = 0 : i64, tpu.core_type = #tpu.core_type<tc>, window_params = [{transform_indices = @transform_0, window_bounds = array<i64: 8, 256>}, {transform_indices = @transform_1, window_bounds = array<i64: 8, 256>}, {transform_indices = @transform_2, window_bounds = array<i64: 8, 2>}, {transform_indices = @transform_3, window_bounds = array<i64: 8, 256>}]} {
    %c0 = arith.constant 0 : index
    %c0_0 = arith.constant 0 : index
    %0 = vector.load %arg4[%c0, %c0_0] : memref<8x2xf32, #tpu.memory_space<vmem>>, vector<8x1xf32>
    %c0_1 = arith.constant 0 : index
    %c1 = arith.constant 1 : index
    %1 = vector.load %arg4[%c0_1, %c1] : memref<8x2xf32, #tpu.memory_space<vmem>>, vector<8x1xf32>
    %c0_2 = arith.constant 0 : index
    %c0_3 = arith.constant 0 : index
    %2 = vector.load %arg2[%c0_2, %c0_3] : memref<8x256xf32, #tpu.memory_space<vmem>>, vector<8x256xf32>
    %3 = vector.broadcast %0 : vector<8x1xf32> to vector<8x256xf32>
    %4 = arith.mulf %3, %2 : vector<8x256xf32>
    %c0_4 = arith.constant 0 : index
    %c0_5 = arith.constant 0 : index
    %5 = vector.load %arg3[%c0_4, %c0_5] : memref<8x256xf32, #tpu.memory_space<vmem>>, vector<8x256xf32>
    %6 = vector.broadcast %1 : vector<8x1xf32> to vector<8x256xf32>
    %7 = arith.mulf %6, %5 : vector<8x256xf32>
    %8 = arith.addf %4, %7 : vector<8x256xf32>
    %c0_6 = arith.constant 0 : index
    %c0_7 = arith.constant 0 : index
    %9 = vector.load %arg5[%c0_6, %c0_7] : memref<8x256xf32, #tpu.memory_space<vmem>>, vector<8x256xf32>
    tpu.vector_store %arg5[%c0_6, %c0_7], %8 {strides = array<i32>} : memref<8x256xf32, #tpu.memory_space<vmem>>, vector<8x256xf32>,
    return
  }
  func.func @transform_0(%arg0: i32, %arg1: i32) -> (i32, i32) {
    %c0_i32 = arith.constant 0 : i32
    return %arg0, %arg1 : i32, i32
  }
  func.func @transform_1(%arg0: i32, %arg1: i32) -> (i32, i32) {
    %c0_i32 = arith.constant 0 : i32
    return %arg0, %arg1 : i32, i32
  }
  func.func @transform_2(%arg0: i32, %arg1: i32) -> (i32, i32) {
    %c0_i32 = arith.constant 0 : i32
    %c0_i32_0 = arith.constant 0 : i32
    return %arg0, %c0_i32 : i32, i32
  }
  func.func @transform_3(%arg0: i32, %arg1: i32) -> (i32, i32) {
    %c0_i32 = arith.constant 0 : i32
    return %arg0, %arg1 : i32, i32
  }
}

</mosaic_0001>

<llo_original>
// kernel: squeeze.3
$region0: #{squeeze.3}
  %s0 = inlined_call_operand.vmem [shape: bf16[8], index: 0, kind: input, shape index: {}]
  %s1 = inlined_call_operand.vmem [shape: bf16[2,4], index: 1, kind: output, shape index: {}]
  $region1: #{squeeze.3} parent=0
    #allocation0 [shape = 'u8[4096]{0}', space=vmem, size = 0x1000, scoped, tag = 'scoped mem for output reshape']
    #allocation1 [shape = 'u8[4096]{0}', space=vmem, size = 0x1000, scoped, tag = 'scoped mem for input reshape']
    %s3 = smul.u32 1, 2
    %s4 = sshllo.u32 0, %s3
    %s5 = sshrl.u32 %s4, 1
    %s6 = sor.u32 %s4, %s5
    %s7 = sand.u32 %s6, 85
    %s8 = sshrl.u32 %s7, 1
    %s9 = sor.u32 %s7, %s8
    %s10 = sand.u32 51, %s9
    %s11 = sshrl.u32 %s10, 2
    %s12 = sor.u32 %s10, %s11
    %s13 = sand.u32 15, %s12
    %v14 = vld [vmem:[%s0] sm:%s13]
    %v15 = vunpack.c.l.bf16 %v14
    %v16 = vunpack.c.h.bf16 %v14
    %17 = vst [vmem:[#allocation1] sm:%s4] %v15
    %v18 = vld [vmem:[#allocation1] sm:$0x1]
    %vm19 = vcmask 31744
    %20 = vst.msk [vmem:[#allocation0] sm:$0x1] %vm19, %v18
    %v21 = vld [vmem:[#allocation1] sm:$0x1]
    %22 = vrot.lane.b32.xlu0 %v21, 124
    %v23 = vpop.permute.xlu0 %22
    %vm24 = vcmask 31744
    %s25 = scalar_lea.vmem [#allocation0], 1
    %26 = vst.msk [vmem:[%s25] sm:$0x1] %vm24, %v23
    %s28 = smul.u32 1, 2
    %s29 = sshllo.u32 0, %s28
    %s30 = sshrl.u32 %s28, 1
    %v31 = vld [vmem:[#allocation0] sm:%s29]
    %v32 = vpack.c.bf16 0.0, %v31
    %s33 = sshllo.u32 0, %s30
    %34 = vst [vmem:[%s1] sm:%s33] %v32

// kernel: squeeze.4
$region0: #{squeeze.4}
  %s0 = inlined_call_operand.vmem [shape: f32[2,1,4], index: 0, kind: input, shape index: {}]
  %s1 = inlined_call_operand.vmem [shape: f32[8,1], index: 1, kind: output, shape index: {}]
  $region1: #{squeeze.4} parent=0
    #allocation0 [shape = 'u8[4096]{0}', space=vmem, size = 0x1000, scoped, tag = 'scoped mem for output reshape']
    #allocation1 [shape = 'u8[4096]{0}', space=vmem, size = 0x1000, scoped, tag = 'scoped mem for input reshape']
    %s3 = sshllo.u32 0, 2
    %v4 = vld [vmem:[%s0] sm:%s3]
    %5 = vst [vmem:[#allocation1] sm:%s3] %v4
    %v6 = vld [vmem:[#allocation1] sm:$0x1]
    %vm7 = vcmask 31744
    %8 = vst.msk [vmem:[#allocation0] sm:$0x1] %vm7, %v6
    %s9 = scalar_lea.vmem [#allocation1], 1
    %v10 = vld [vmem:[%s9] sm:$0x1]
    %11 = vrot.lane.b32.xlu0 %v10, 4
    %v12 = vpop.permute.xlu0 %11
    %vm13 = vcmask 64544
    %14 = vst.msk [vmem:[#allocation0] sm:$0x1] %vm13, %v12
    %s16 = sshllo.u32 0, 1
    %v18 = vld [vmem:[#allocation0] sm:%s16]
    %s19 = sshllo.u32 0, 1
    %20 = vst [vmem:[%s1] sm:%s19] %v18

// kernel: attgate2_forward.2
$region0: #{attgate2_forward.2}
  #allocation0 [shape = 'u32[]', space=smem, size = 0x4, offset = 0x4, fixed_abs, tag = 'smem constant byte address 0x4 - core index']
  #allocation1 [shape = 'u32[144,128]{1,0:T(1,128)}', space=vmem, size = 0x12000, scoped, tag = 'internal scratch']
  #allocation2 [shape = 'f32[8,1]{1,0:T(8,128)}', space=vmem, size = 0x1000, scoped, tag = 'scratch operand']
  %s0 = inlined_call_operand.vmem [shape: f32[8,256], index: 0, kind: input, shape index: {}]
  %s1 = inlined_call_operand.vmem [shape: f32[8,256], index: 1, kind: input, shape index: {}]
  %s2 = inlined_call_operand.vmem [shape: f32[8,1], index: 2, kind: output, shape index: {}]
  %s3 = sld [smem:[#allocation0]]
  $region26: #{attgate2_forward.2} parent=0
    _
  %s5 = ssub.s32 1, %s3
  %s6 = scalar_select 0, %s5, %s3
  // Predicated region
  $region2: #{attgate2_forward.2} parent=0 // pred_check
    _
  $region3: #{attgate2_forward.2} parent=0 // pred_check_branch
    %8 = sbr.rel (0) target = $region5
  $region4: #{attgate2_forward.2} parent=0 // pred_region
    _
  $region5: #{attgate2_forward.2} parent=0 // pred_fallthru
    _
  // Predicated region
  $region6: #{attgate2_forward.2} parent=0 // pred_check
    _
  $region7: #{attgate2_forward.2} parent=0 // pred_check_branch
    %10 = sbr.rel (0) target = $region9
  $region8: #{attgate2_forward.2} parent=0 // pred_region
    _
  $region9: #{attgate2_forward.2} parent=0 // pred_fallthru
    _
  %p11 = scmp.eq.s32.totalorder 0, 0
  // Predicated region
  $region10: #{attgate2_forward.2} parent=0 // pred_check
    %p12 = pneg %p11
  $region11: #{attgate2_forward.2} parent=0 // pred_check_branch
    %14 = sbr.rel (%p12) target = $region13
  $region12: #{attgate2_forward.2} parent=0 // pred_region
    %vm15 = vcmask 7168
    %16 = vst.msk [vmem:[#allocation2] sm:$0xff] %vm15, 0.0
  $region13: #{attgate2_forward.2} parent=0 // pred_fallthru
    _
  %v17 = vld [vmem:[%s0] sm:$0xff]
  %v18 = vld [vmem:[%s0 + $0x8] sm:$0xff]
  %v19 = vld [vmem:[%s1] sm:$0xff]
  %v20 = vld [vmem:[%s1 + $0x8] sm:$0xff]
  %v21 = vadd.f32 %v17, %v19
  %v22 = vadd.f32 %v18, %v20
  %v23 = vld [vmem:[#allocation2] sm:$0xff]
  %v24 = vadd.f32 %v21, %v22
  %25 = vadd.xlane.f32.xlu0 %v24
  %v26 = vpop.xlane.xlu0 %25
  %v27 = vadd.f32 %v23, %v26
  %vm28 = vcmask 7168
  %29 = vst.msk [vmem:[#allocation2] sm:$0xff] %vm28, %v27
  // Predicated region
  $region14: #{attgate2_forward.2} parent=0 // pred_check
    %p30 = pneg %p11
  $region15: #{attgate2_forward.2} parent=0 // pred_check_branch
    %32 = sbr.rel (%p30) target = $region17
  $region16: #{attgate2_forward.2} parent=0 // pred_region
    %v33 = vld [vmem:[#allocation2] sm:$0xff]
    %v34 = vmul.f32 %v33, 0.00390625
    %35 = vst.msk [vmem:[%s2] sm:$0xff] %vm28, %v34
  $region17: #{attgate2_forward.2} parent=0 // pred_fallthru
    _
  // Predicated region
  $region18: #{attgate2_forward.2} parent=0 // pred_check
    _
  $region19: #{attgate2_forward.2} parent=0 // pred_check_branch
    %37 = sbr.rel (0) target = $region21
  $region20: #{attgate2_forward.2} parent=0 // pred_region
    _
  $region21: #{attgate2_forward.2} parent=0 // pred_fallthru
    _
  // Predicated region
  $region22: #{attgate2_forward.2} parent=0 // pred_check
    _
  $region23: #{attgate2_forward.2} parent=0 // pred_check_branch
    %39 = sbr.rel (0) target = $region25
  $region24: #{attgate2_forward.2} parent=0 // pred_region
    _
  $region25: #{attgate2_forward.2} parent=0 // pred_fallthru
    _

// kernel: attgate2_forward.3
$region0: #{attgate2_forward.3}
  #allocation0 [shape = 'u32[]', space=smem, size = 0x4, offset = 0x4, fixed_abs, tag = 'smem constant byte address 0x4 - core index']
  #allocation1 [shape = 'u32[144,128]{1,0:T(1,128)}', space=vmem, size = 0x12000, scoped, tag = 'internal scratch']
  %s0 = inlined_call_operand.vmem [shape: f32[8,256], index: 0, kind: input, shape index: {}]
  %s1 = inlined_call_operand.vmem [shape: f32[8,256], index: 1, kind: input, shape index: {}]
  %s2 = inlined_call_operand.vmem [shape: f32[8,2], index: 2, kind: input, shape index: {}]
  %s3 = inlined_call_operand.vmem [shape: f32[8,256], index: 3, kind: output, shape index: {}]
  %s4 = sld [smem:[#allocation0]]
  $region22: #{attgate2_forward.3} parent=0
    _
  %s6 = ssub.s32 1, %s4
  %s7 = scalar_select 0, %s6, %s4
  // Predicated region
  $region2: #{attgate2_forward.3} parent=0 // pred_check
    _
  $region3: #{attgate2_forward.3} parent=0 // pred_check_branch
    %9 = sbr.rel (0) target = $region5
  $region4: #{attgate2_forward.3} parent=0 // pred_region
    _
  $region5: #{attgate2_forward.3} parent=0 // pred_fallthru
    _
  // Predicated region
  $region6: #{attgate2_forward.3} parent=0 // pred_check
    _
  $region7: #{attgate2_forward.3} parent=0 // pred_check_branch
    %11 = sbr.rel (0) target = $region9
  $region8: #{attgate2_forward.3} parent=0 // pred_region
    _
  $region9: #{attgate2_forward.3} parent=0 // pred_fallthru
    _
  // Predicated region
  $region10: #{attgate2_forward.3} parent=0 // pred_check
    _
  $region11: #{attgate2_forward.3} parent=0 // pred_check_branch
    %13 = sbr.rel (0) target = $region13
  $region12: #{attgate2_forward.3} parent=0 // pred_region
    _
  $region13: #{attgate2_forward.3} parent=0 // pred_fallthru
    _
  %v14 = vld [vmem:[%s2] sm:$0xff]
  %v15 = vld [vmem:[%s0] sm:$0xff]
  %v16 = vld [vmem:[%s0 + $0x8] sm:$0xff]
  %18 = vset.pattern.permute.xlu0 0
  %19 = vperm.xlu0 %18, %v14
  %v20 = vpop.permute.xlu0 %19
  %v22 = vmul.f32 %v20, %v15
  %v23 = vmul.f32 %v20, %v16
  %v24 = vld [vmem:[%s1] sm:$0xff]
  %v25 = vld [vmem:[%s1 + $0x8] sm:$0xff]
  %26 = vset.pattern.permute.xlu0 1
  %27 = vperm.xlu0 %26, %v14
  %v28 = vpop.permute.xlu0 %27
  %v30 = vmul.f32 %v28, %v24
  %v31 = vmul.f32 %v28, %v25
  %v32 = vadd.f32 %v22, %v30
  %v33 = vadd.f32 %v23, %v31
  %34 = vst [vmem:[%s3] sm:$0xff] %v32
  %35 = vst [vmem:[%s3 + $0x8] sm:$0xff] %v33
  // Predicated region
  $region14: #{attgate2_forward.3} parent=0 // pred_check
    _
  $region15: #{attgate2_forward.3} parent=0 // pred_check_branch
    %37 = sbr.rel (0) target = $region17
  $region16: #{attgate2_forward.3} parent=0 // pred_region
    _
  $region17: #{attgate2_forward.3} parent=0 // pred_fallthru
    _
  // Predicated region
  $region18: #{attgate2_forward.3} parent=0 // pred_check
    _
  $region19: #{attgate2_forward.3} parent=0 // pred_check_branch
    %39 = sbr.rel (0) target = $region21
  $region20: #{attgate2_forward.3} parent=0 // pred_region
    _
  $region21: #{attgate2_forward.3} parent=0 // pred_fallthru
    _

</llo_original>
